<compile_context>
chip_gen: v7x
topology: tpu7x:2x2x1
jax: 0.10.0
libtpu: 0.0.40
codegen_flags: <defaults>
</compile_context>

<pallas_src>
import jax
import jax.numpy as jnp
from jax.experimental import pallas as pl
from jax.experimental.pallas import tpu as pltpu

BN_EPS = 1e-5
LEAKY_SLOPE = 0.01


def _leaky_relu(x, slope=LEAKY_SLOPE):
    return jnp.where(x > 0, x, slope * x)


def _round_up(x, m):
    return ((x + m - 1) // m) * m


# ----------------------------------------------------------------------------
# Kernel: three matmul + bias + leaky_relu stages; weights stay VMEM resident
# (constant index maps), the batch is streamed over a 1-D "parallel" grid.
# ----------------------------------------------------------------------------
def fp_mlp_kernel(x_ref, w1_ref, b1_ref, w2_ref, b2_ref, w3_ref, b3_ref,
                  out_ref):
    # layer 0: Linear(F, F//2) [BN folded], bf16 MXU, f32 accumulate
    h = jnp.dot(x_ref[...], w1_ref[...], preferred_element_type=jnp.float32)
    h = _leaky_relu(h + b1_ref[...])

    # layer 1: Linear(F//2, F//4) [BN folded]
    h = jnp.dot(h.astype(jnp.bfloat16), w2_ref[...],
                preferred_element_type=jnp.float32)
    h = _leaky_relu(h + b2_ref[...])

    # final layer: Linear(F//4, n_classes) (no BN / activation / dropout)
    out = jnp.dot(h.astype(jnp.bfloat16), w3_ref[...],
                  preferred_element_type=jnp.float32)
    out_ref[...] = (out + b3_ref[...]).astype(out_ref.dtype)


# ----------------------------------------------------------------------------
# Host-side param prep: fold eval-mode BN into the Linear, cast weights bf16.
# ----------------------------------------------------------------------------
def _fold_bn(w, b, g, be, m, v):
    scale = g * jax.lax.rsqrt(v + BN_EPS)            # (1, f_out)
    return w * scale, (b - m) * scale + be


def pack_params(p):
    w1f, b1f = _fold_bn(p["w1"], p["b1"], p["g1"], p["be1"], p["m1"], p["v1"])
    w2f, b2f = _fold_bn(p["w2"], p["b2"], p["g2"], p["be2"], p["m2"], p["v2"])
    return (w1f.astype(jnp.bfloat16), b1f.astype(jnp.float32),
            w2f.astype(jnp.bfloat16), b2f.astype(jnp.float32),
            p["w3"].astype(jnp.bfloat16), p["b3"].astype(jnp.float32))


# ----------------------------------------------------------------------------
# Wrapper: batch-tiled pallas_call; narrow (n_classes-wide) output writeback.
# ----------------------------------------------------------------------------
def fp_model_forward(x, params, *, block_b=2048):
    B, F_in = x.shape
    w1, b1, w2, b2, w3, b3 = pack_params(params)
    n_classes = w3.shape[1]

    # binary {0,1} fingerprints are exact in bf16 -> halves input DMA traffic
    x = x.astype(jnp.bfloat16)

    # Batch tile: multiple of 8 (sublane rule); large enough to amortize the
    # per-grid-step overhead, capped so the grid keeps >= 2 steps (v7x has two
    # TensorCores that split a "parallel" grid axis).
    TB = _round_up(min(block_b, B), 8)
    if B > 8 and pl.cdiv(B, TB) < 2:
        TB = _round_up(pl.cdiv(B, 2), 8)
    Bp = _round_up(B, TB)
    if Bp != B:
        x = jnp.pad(x, ((0, Bp - B), (0, 0)))

    h1, h2 = w1.shape[1], w2.shape[1]
    flops = 2 * Bp * (F_in * h1 + h1 * h2 + h2 * n_classes)
    bytes_accessed = (Bp * F_in * 2 + Bp * n_classes * 4
                      + (w1.size + w2.size + w3.size) * 2
                      + (b1.size + b2.size + b3.size) * 4)

    const = lambda i: (0, 0)
    out = pl.pallas_call(
        fp_mlp_kernel,
        out_shape=jax.ShapeDtypeStruct((Bp, n_classes), jnp.float32),
        grid_spec=pltpu.PrefetchScalarGridSpec(
            num_scalar_prefetch=0,
            grid=(Bp // TB,),
            in_specs=[
                pl.BlockSpec((TB, F_in), lambda i: (i, 0)),   # x tile (streamed)
                pl.BlockSpec(w1.shape, const),                # resident params
                pl.BlockSpec(b1.shape, const),
                pl.BlockSpec(w2.shape, const),
                pl.BlockSpec(b2.shape, const),
                pl.BlockSpec(w3.shape, const),
                pl.BlockSpec(b3.shape, const),
            ],
            out_specs=pl.BlockSpec((TB, n_classes), lambda i: (i, 0)),
        ),
        compiler_params=pltpu.CompilerParams(
            dimension_semantics=("parallel",)),               # megacore on v7x
        cost_estimate=pl.CostEstimate(flops=flops, transcendentals=0,
                                      bytes_accessed=bytes_accessed),
    )(x, w1, b1, w2, b2, w3, b3)

    return out[:B]


# ----------------------------------------------------------------------------
# Synthetic params matching ClassificationLayer(num_layers=3):
#   Linear(32,16)+BN(16)+leaky_relu+dropout
#   Linear(16, 8)+BN(8) +leaky_relu+dropout
#   Linear(8, n_classes)
# ----------------------------------------------------------------------------
def init_params(key, out_lin=32, n_classes=2):
    dims = [out_lin, out_lin // 2, out_lin // 4, n_classes]  # 32 -> 16 -> 8 -> 2
    keys = jax.random.split(key, 16)
    ki = iter(keys)

    def lin(fan_in, fan_out):
        # torch Linear weight is (out, in); we store the transpose (in, out).
        w = jax.random.uniform(next(ki), (fan_in, fan_out), jnp.float32,
                               -1.0, 1.0) / jnp.sqrt(jnp.float32(fan_in))
        b = jax.random.uniform(next(ki), (1, fan_out), jnp.float32,
                               -1.0, 1.0) / jnp.sqrt(jnp.float32(fan_in))
        return w, b

    def bn(f):
        g = 1.0 + 0.1 * jax.random.normal(next(ki), (1, f), jnp.float32)
        be = 0.1 * jax.random.normal(next(ki), (1, f), jnp.float32)
        m = 0.05 * jax.random.normal(next(ki), (1, f), jnp.float32)
        v = 1.0 + 0.1 * jax.random.uniform(next(ki), (1, f), jnp.float32)
        return g, be, m, v

    w1, b1 = lin(dims[0], dims[1])
    g1, be1, m1, v1 = bn(dims[1])
    w2, b2 = lin(dims[1], dims[2])
    g2, be2, m2, v2 = bn(dims[2])
    w3, b3 = lin(dims[2], dims[3])

    return dict(w1=w1, b1=b1, g1=g1, be1=be1, m1=m1, v1=v1,
                w2=w2, b2=b2, g2=g2, be2=be2, m2=m2, v2=v2,
                w3=w3, b3=b3)


# Original (BN-unfused, f32) semantics -- loose check (bf16 weight rounding).
def reference_forward(x, p):
    def bn_eval(h, g, be, m, v):
        return (h - m) * (g * jax.lax.rsqrt(v + BN_EPS)) + be

    h = x @ p["w1"] + p["b1"]
    h = _leaky_relu(bn_eval(h, p["g1"], p["be1"], p["m1"], p["v1"]))
    h = h @ p["w2"] + p["b2"]
    h = _leaky_relu(bn_eval(h, p["g2"], p["be2"], p["m2"], p["v2"]))
    return h @ p["w3"] + p["b3"]


# Same folded bf16 weights / f32 accumulation as the kernel -- tight check.
def matched_reference(x, packed):
    w1, b1, w2, b2, w3, b3 = packed
    hp = jax.lax.Precision.HIGHEST
    h = x.astype(jnp.bfloat16).astype(jnp.float32)
    h = _leaky_relu(jnp.dot(h, w1.astype(jnp.float32), precision=hp) + b1)
    h = h.astype(jnp.bfloat16).astype(jnp.float32)
    h = _leaky_relu(jnp.dot(h, w2.astype(jnp.float32), precision=hp) + b2)
    h = h.astype(jnp.bfloat16).astype(jnp.float32)
    return jnp.dot(h, w3.astype(jnp.float32), precision=hp) + b3


if __name__ == "__main__":
    key = jax.random.PRNGKey(0)
    k_fp, k_par, k_fp2 = jax.random.split(key, 3)

    B, FP_SIZE, N_CLASSES = 8, 32, 2

    # TODO(synk): RDKit Morgan fingerprint generation from SMILES has no Pallas
    # equivalent; synthesize a binary {0,1} fingerprint matrix instead.
    x = (jax.random.uniform(k_fp, (B, FP_SIZE)) > 0.5).astype(jnp.float32)
    params = init_params(k_par, out_lin=FP_SIZE, n_classes=N_CLASSES)
    packed = pack_params(params)

    out = jax.block_until_ready(fp_model_forward(x, params))
    assert out.shape == (B, N_CLASSES)
    assert jnp.allclose(out, matched_reference(x, packed),
                        atol=1e-3, rtol=1e-3), "mismatch vs matched reference"
    assert jnp.allclose(out, reference_forward(x, params),
                        atol=1e-1, rtol=1e-1), "mismatch vs f32 reference"

    # Exercise the tiled / multi-step grid path (batch not a multiple of TB).
    B2 = 1000
    x2 = (jax.random.uniform(k_fp2, (B2, FP_SIZE)) > 0.5).astype(jnp.float32)
    out2 = jax.block_until_ready(fp_model_forward(x2, params, block_b=2048))
    assert out2.shape == (B2, N_CLASSES)
    assert jnp.allclose(out2, matched_reference(x2, packed),
                        atol=1e-3, rtol=1e-3), "mismatch (tiled path)"
    assert jnp.allclose(out2, reference_forward(x2, params),
                        atol=1e-1, rtol=1e-1), "mismatch vs f32 reference (tiled)"

    print("KERNEL_OK")
</pallas_src>

<mosaic_0001>
module attributes {stable_mosaic.version = 11 : i64} {
  func.func @fp_mlp_kernel(%arg0: i32, %arg1: memref<8x32xbf16, #tpu.memory_space<vmem>>, %arg2: memref<32x16xbf16, #tpu.memory_space<vmem>>, %arg3: memref<1x16xf32, #tpu.memory_space<vmem>>, %arg4: memref<16x8xbf16, #tpu.memory_space<vmem>>, %arg5: memref<1x8xf32, #tpu.memory_space<vmem>>, %arg6: memref<8x2xbf16, #tpu.memory_space<vmem>>, %arg7: memref<1x2xf32, #tpu.memory_space<vmem>>, %arg8: memref<8x2xf32, #tpu.memory_space<vmem>>) attributes {dimension_semantics = [#tpu.dimension_semantics<parallel>], iteration_bounds = array<i64: 1>, scalar_prefetch = 0 : i64, scratch_operands = 0 : i64, tpu.core_type = #tpu.core_type<tc>, window_params = [{transform_indices = @transform_0, window_bounds = array<i64: 8, 32>}, {pipeline_mode = #tpu.pipeline_mode<synchronous>, transform_indices = @transform_1, window_bounds = array<i64: 32, 16>}, {pipeline_mode = #tpu.pipeline_mode<synchronous>, transform_indices = @transform_2, window_bounds = array<i64: 1, 16>}, {pipeline_mode = #tpu.pipeline_mode<synchronous>, transform_indices = @transform_3, window_bounds = array<i64: 16, 8>}, {pipeline_mode = #tpu.pipeline_mode<synchronous>, transform_indices = @transform_4, window_bounds = array<i64: 1, 8>}, {pipeline_mode = #tpu.pipeline_mode<synchronous>, transform_indices = @transform_5, window_bounds = array<i64: 8, 2>}, {pipeline_mode = #tpu.pipeline_mode<synchronous>, transform_indices = @transform_6, window_bounds = array<i64: 1, 2>}, {transform_indices = @transform_7, window_bounds = array<i64: 8, 2>}]} {
    %c0 = arith.constant 0 : index
    %c0_0 = arith.constant 0 : index
    %0 = vector.load %arg1[%c0, %c0_0] : memref<8x32xbf16, #tpu.memory_space<vmem>>, vector<8x32xbf16>
    %c0_1 = arith.constant 0 : index
    %c0_2 = arith.constant 0 : index
    %1 = vector.load %arg2[%c0_1, %c0_2] : memref<32x16xbf16, #tpu.memory_space<vmem>>, vector<32x16xbf16>
    %cst = arith.constant dense<0.000000e+00> : vector<8x16xf32>
    %2 = tpu.matmul %0, %1, %cst {dimension_numbers = #tpu.dot_dimension_numbers<[1], [0], [0], [1], [0, 0, 1, 1], [], []>} : vector<8x32xbf16>, vector<32x16xbf16>, vector<8x16xf32> -> vector<8x16xf32>
    %c0_3 = arith.constant 0 : index
    %c0_4 = arith.constant 0 : index
    %3 = vector.load %arg3[%c0_3, %c0_4] : memref<1x16xf32, #tpu.memory_space<vmem>>, vector<1x16xf32>
    %4 = vector.broadcast %3 : vector<1x16xf32> to vector<8x16xf32>
    %5 = arith.addf %2, %4 : vector<8x16xf32>
    %cst_5 = arith.constant 0.000000e+00 : f32
    %6 = vector.broadcast %cst_5 : f32 to vector<8x16xf32>
    %7 = arith.cmpf ogt, %5, %6 : vector<8x16xf32>
    %cst_6 = arith.constant 0.00999999977 : f32
    %8 = vector.broadcast %cst_6 : f32 to vector<8x16xf32>
    %9 = arith.mulf %8, %5 : vector<8x16xf32>
    %10 = arith.select %7, %5, %9 : vector<8x16xi1>, vector<8x16xf32>
    %11 = arith.truncf %10 : vector<8x16xf32> to vector<8x16xbf16>
    %c0_7 = arith.constant 0 : index
    %c0_8 = arith.constant 0 : index
    %12 = vector.load %arg4[%c0_7, %c0_8] : memref<16x8xbf16, #tpu.memory_space<vmem>>, vector<16x8xbf16>
    %cst_9 = arith.constant dense<0.000000e+00> : vector<8x8xf32>
    %13 = tpu.matmul %11, %12, %cst_9 {dimension_numbers = #tpu.dot_dimension_numbers<[1], [0], [0], [1], [0, 0, 1, 1], [], []>} : vector<8x16xbf16>, vector<16x8xbf16>, vector<8x8xf32> -> vector<8x8xf32>
    %c0_10 = arith.constant 0 : index
    %c0_11 = arith.constant 0 : index
    %14 = vector.load %arg5[%c0_10, %c0_11] : memref<1x8xf32, #tpu.memory_space<vmem>>, vector<1x8xf32>
    %15 = vector.broadcast %14 : vector<1x8xf32> to vector<8x8xf32>
    %16 = arith.addf %13, %15 : vector<8x8xf32>
    %cst_12 = arith.constant 0.000000e+00 : f32
    %17 = vector.broadcast %cst_12 : f32 to vector<8x8xf32>
    %18 = arith.cmpf ogt, %16, %17 : vector<8x8xf32>
    %cst_13 = arith.constant 0.00999999977 : f32
    %19 = vector.broadcast %cst_13 : f32 to vector<8x8xf32>
    %20 = arith.mulf %19, %16 : vector<8x8xf32>
    %21 = arith.select %18, %16, %20 : vector<8x8xi1>, vector<8x8xf32>
    %22 = arith.truncf %21 : vector<8x8xf32> to vector<8x8xbf16>
    %c0_14 = arith.constant 0 : index
    %c0_15 = arith.constant 0 : index
    %23 = vector.load %arg6[%c0_14, %c0_15] : memref<8x2xbf16, #tpu.memory_space<vmem>>, vector<8x2xbf16>
    %cst_16 = arith.constant dense<0.000000e+00> : vector<8x2xf32>
    %24 = tpu.matmul %22, %23, %cst_16 {dimension_numbers = #tpu.dot_dimension_numbers<[1], [0], [0], [1], [0, 0, 1, 1], [], []>} : vector<8x8xbf16>, vector<8x2xbf16>, vector<8x2xf32> -> vector<8x2xf32>
    %c0_17 = arith.constant 0 : index
    %c0_18 = arith.constant 0 : index
    %25 = vector.load %arg7[%c0_17, %c0_18] : memref<1x2xf32, #tpu.memory_space<vmem>>, vector<1x2xf32>
    %26 = vector.broadcast %25 : vector<1x2xf32> to vector<8x2xf32>
    %27 = arith.addf %24, %26 : vector<8x2xf32>
    %c0_19 = arith.constant 0 : index
    %c0_20 = arith.constant 0 : index
    %28 = vector.load %arg8[%c0_19, %c0_20] : memref<8x2xf32, #tpu.memory_space<vmem>>, vector<8x2xf32>
    tpu.vector_store %arg8[%c0_19, %c0_20], %27 {strides = array<i32>} : memref<8x2xf32, #tpu.memory_space<vmem>>, vector<8x2xf32>,
    return
  }
  func.func @transform_0(%arg0: i32) -> (i32, i32) {
    %c0_i32 = arith.constant 0 : i32
    %c0_i32_0 = arith.constant 0 : i32
    return %arg0, %c0_i32 : i32, i32
  }
  func.func @transform_1(%arg0: i32) -> (i32, i32) {
    %c0_i32 = arith.constant 0 : i32
    %c0_i32_0 = arith.constant 0 : i32
    %c0_i32_1 = arith.constant 0 : i32
    return %c0_i32, %c0_i32_0 : i32, i32
  }
  func.func @transform_2(%arg0: i32) -> (i32, i32) {
    %c0_i32 = arith.constant 0 : i32
    %c0_i32_0 = arith.constant 0 : i32
    %c0_i32_1 = arith.constant 0 : i32
    return %c0_i32, %c0_i32_0 : i32, i32
  }
  func.func @transform_3(%arg0: i32) -> (i32, i32) {
    %c0_i32 = arith.constant 0 : i32
    %c0_i32_0 = arith.constant 0 : i32
    %c0_i32_1 = arith.constant 0 : i32
    return %c0_i32, %c0_i32_0 : i32, i32
  }
  func.func @transform_4(%arg0: i32) -> (i32, i32) {
    %c0_i32 = arith.constant 0 : i32
    %c0_i32_0 = arith.constant 0 : i32
    %c0_i32_1 = arith.constant 0 : i32
    return %c0_i32, %c0_i32_0 : i32, i32
  }
  func.func @transform_5(%arg0: i32) -> (i32, i32) {
    %c0_i32 = arith.constant 0 : i32
    %c0_i32_0 = arith.constant 0 : i32
    %c0_i32_1 = arith.constant 0 : i32
    return %c0_i32, %c0_i32_0 : i32, i32
  }
  func.func @transform_6(%arg0: i32) -> (i32, i32) {
    %c0_i32 = arith.constant 0 : i32
    %c0_i32_0 = arith.constant 0 : i32
    %c0_i32_1 = arith.constant 0 : i32
    return %c0_i32, %c0_i32_0 : i32, i32
  }
  func.func @transform_7(%arg0: i32) -> (i32, i32) {
    %c0_i32 = arith.constant 0 : i32
    %c0_i32_0 = arith.constant 0 : i32
    return %arg0, %c0_i32 : i32, i32
  }
}

</mosaic_0001>

<llo_original>
// kernel: tpu_custom_call.1
$region0: #{tpu_custom_call.1}
  #allocation0 [shape = 'u32[]', space=smem, size = 0x4, offset = 0x4, fixed_abs, tag = 'smem constant byte address 0x4 - core index']
  #allocation1 [shape = 'u32[144,128]{1,0:T(1,128)}', space=vmem, size = 0x12000, scoped, tag = 'internal scratch']
  %s0 = inlined_call_operand.vmem [shape: bf16[8,32], index: 0, kind: input, shape index: {}]
  %s1 = inlined_call_operand.vmem [shape: bf16[32,16], index: 1, kind: input, shape index: {}]
  %s2 = inlined_call_operand.vmem [shape: f32[1,16], index: 2, kind: input, shape index: {}]
  %s3 = inlined_call_operand.vmem [shape: bf16[16,8], index: 3, kind: input, shape index: {}]
  %s4 = inlined_call_operand.vmem [shape: f32[1,8], index: 4, kind: input, shape index: {}]
  %s5 = inlined_call_operand.vmem [shape: bf16[8,2], index: 5, kind: input, shape index: {}]
  %s6 = inlined_call_operand.vmem [shape: f32[1,2], index: 6, kind: input, shape index: {}]
  %s7 = inlined_call_operand.vmem [shape: f32[8,2], index: 7, kind: output, shape index: {}]
  %s8 = sld [smem:[#allocation0]]
  $region38: #{tpu_custom_call.1} parent=0
    _
  %s10 = ssub.s32 1, %s8
  %s11 = scalar_select 0, %s10, %s8
  // Predicated region
  $region2: #{tpu_custom_call.1} parent=0 // pred_check
    _
  $region3: #{tpu_custom_call.1} parent=0 // pred_check_branch
    %13 = sbr.rel (0) target = $region5
  $region4: #{tpu_custom_call.1} parent=0 // pred_region
    _
  $region5: #{tpu_custom_call.1} parent=0 // pred_fallthru
    _
  // Predicated region
  $region6: #{tpu_custom_call.1} parent=0 // pred_check
    _
  $region7: #{tpu_custom_call.1} parent=0 // pred_check_branch
    %15 = sbr.rel (0) target = $region9
  $region8: #{tpu_custom_call.1} parent=0 // pred_region
    _
  $region9: #{tpu_custom_call.1} parent=0 // pred_fallthru
    _
  // Predicated region
  $region10: #{tpu_custom_call.1} parent=0 // pred_check
    _
  $region11: #{tpu_custom_call.1} parent=0 // pred_check_branch
    %17 = sbr.rel (0) target = $region13
  $region12: #{tpu_custom_call.1} parent=0 // pred_region
    _
  $region13: #{tpu_custom_call.1} parent=0 // pred_fallthru
    _
  // Predicated region
  $region14: #{tpu_custom_call.1} parent=0 // pred_check
    _
  $region15: #{tpu_custom_call.1} parent=0 // pred_check_branch
    %19 = sbr.rel (0) target = $region17
  $region16: #{tpu_custom_call.1} parent=0 // pred_region
    _
  $region17: #{tpu_custom_call.1} parent=0 // pred_fallthru
    _
  // Predicated region
  $region18: #{tpu_custom_call.1} parent=0 // pred_check
    _
  $region19: #{tpu_custom_call.1} parent=0 // pred_check_branch
    %21 = sbr.rel (0) target = $region21
  $region20: #{tpu_custom_call.1} parent=0 // pred_region
    _
  $region21: #{tpu_custom_call.1} parent=0 // pred_fallthru
    _
  // Predicated region
  $region22: #{tpu_custom_call.1} parent=0 // pred_check
    _
  $region23: #{tpu_custom_call.1} parent=0 // pred_check_branch
    %23 = sbr.rel (0) target = $region25
  $region24: #{tpu_custom_call.1} parent=0 // pred_region
    _
  $region25: #{tpu_custom_call.1} parent=0 // pred_fallthru
    _
  // Predicated region
  $region26: #{tpu_custom_call.1} parent=0 // pred_check
    _
  $region27: #{tpu_custom_call.1} parent=0 // pred_check_branch
    %25 = sbr.rel (0) target = $region29
  $region28: #{tpu_custom_call.1} parent=0 // pred_region
    _
  $region29: #{tpu_custom_call.1} parent=0 // pred_fallthru
    _
  %v27 = vld [vmem:[%s0] sm:$0xf]
  %v28 = vld [vmem:[%s1] sm:$0xf]
  %v29 = vld [vmem:[%s1 + $0x4] sm:$0xf]
  %v30 = vld [vmem:[%s1 + $0x8] sm:$0xf]
  %v31 = vld [vmem:[%s1 + $0xc] sm:$0xf]
  %v32 = vld [vmem:[%s2] sm:$0x1]
  %v34 = vlaneseq
  %v35 = vshrl.u32 %v34, 7
  %v36 = vsub.s32 0, %v35
  %v37 = vrot.slane %v32, %v36
  %v43 = vunpack.c.l.b16 %v28
  %v44 = vunpack.c.l.b16 %v29
  %v45 = vunpack.c.l.b16 %v30
  %v46 = vunpack.c.l.b16 %v31
  %v47 = vpack.c.b16 %v44, %v43
  %v48 = vpack.c.b16 %v46, %v45
  %vm51 = vcmask 261120
  %v53 = vsel %vm51, %v27, 0
  %55 = vmatprep.subr.bf16.mxu0 0
  %56 = vmatpush1.bf16.msra.mxu0 %v47
  %57 = vmatprep.subr.bf16.mxu0 0
  %58 = vmatpush1.bf16.msra.mxu0 %v48
  %59 = vmatprep.subr.bf16.mxu0 0
  %60 = vmatpush1.bf16.msra.mxu0 0
  %61 = vmatprep.subr.bf16.mxu0 0
  %62 = vmatpush1.bf16.msra.mxu0 0
  %63 = vmatprep.subr.bf16.mxu0 0
  %64 = vmatpush1.bf16.msra.mxu0 0
  %65 = vmatprep.subr.bf16.mxu0 0
  %66 = vmatpush1.bf16.msra.mxu0 0
  %67 = vmatprep.subr.bf16.mxu0 0
  %68 = vmatpush1.bf16.msra.mxu0 0
  %69 = vmatprep.subr.bf16.mxu0 0
  %70 = vmatpush1.bf16.msra.mxu0 0
  %71 = vmatprep.subr.bf16.mxu0 0
  %72 = vmatpush1.bf16.msra.mxu0 0
  %73 = vmatprep.subr.bf16.mxu0 0
  %74 = vmatpush1.bf16.msra.mxu0 0
  %75 = vmatprep.subr.bf16.mxu0 0
  %76 = vmatpush1.bf16.msra.mxu0 0
  %77 = vmatprep.subr.bf16.mxu0 0
  %78 = vmatpush1.bf16.msra.mxu0 0
  %79 = vmatprep.subr.bf16.mxu0 0
  %80 = vmatpush1.bf16.msra.mxu0 0
  %81 = vmatprep.subr.bf16.mxu0 0
  %82 = vmatpush1.bf16.msra.mxu0 0
  %83 = vmatprep.subr.bf16.mxu0 0
  %84 = vmatpush1.bf16.msra.mxu0 0
  %85 = vmatprep.subr.bf16.mxu0 0
  %86 = vmatpush1.bf16.msra.mxu0 0
  %87 = vmatprep.mubr.bf16.mxu0 0
  %88 = vmatmul.mubr.bf16.gmra.mrb[0].mxu0 %v53
  %v89 = vpop.f32.mrb[0].mxu0
  %v90 = vadd.f32 %v37, %v89
  %v91 = vpop.f32.mrb[0].mxu0
  %v92 = vpop.f32.mrb[0].mxu0
  %v93 = vpop.f32.mrb[0].mxu0
  %94 = vdwg.mxu0
  %vm95 = vcmp.gt.f32.partialorder %v90, 0.0
  %v96 = vmul.f32 %v90, 0.01
  %v97 = vsel %vm95, %v90, %v96
  %v98 = vpack.c.bf16 %v97, %v97
  %v99 = vld [vmem:[%s3] sm:$0xf]
  %v100 = vld [vmem:[%s3 + $0x4] sm:$0xf]
  %v101 = vld [vmem:[%s4] sm:$0x1]
  %v103 = vlaneseq
  %v104 = vshrl.u32 %v103, 7
  %v105 = vsub.s32 0, %v104
  %v106 = vrot.slane %v101, %v105
  %v110 = vunpack.c.l.b16 %v99
  %v111 = vunpack.c.l.b16 %v100
  %v112 = vpack.c.b16 %v111, %v110
  %vm114 = vcmask 130048
  %v116 = vsel %vm114, %v98, 0
  %118 = vmatprep.subr.bf16.mxu0 0
  %119 = vmatpush1.bf16.msra.mxu0 %v112
  %120 = vmatprep.subr.bf16.mxu0 0
  %121 = vmatpush1.bf16.msra.mxu0 0
  %122 = vmatprep.subr.bf16.mxu0 0
  %123 = vmatpush1.bf16.msra.mxu0 0
  %124 = vmatprep.subr.bf16.mxu0 0
  %125 = vmatpush1.bf16.msra.mxu0 0
  %126 = vmatprep.subr.bf16.mxu0 0
  %127 = vmatpush1.bf16.msra.mxu0 0
  %128 = vmatprep.subr.bf16.mxu0 0
  %129 = vmatpush1.bf16.msra.mxu0 0
  %130 = vmatprep.subr.bf16.mxu0 0
  %131 = vmatpush1.bf16.msra.mxu0 0
  %132 = vmatprep.subr.bf16.mxu0 0
  %133 = vmatpush1.bf16.msra.mxu0 0
  %134 = vmatprep.subr.bf16.mxu0 0
  %135 = vmatpush1.bf16.msra.mxu0 0
  %136 = vmatprep.subr.bf16.mxu0 0
  %137 = vmatpush1.bf16.msra.mxu0 0
  %138 = vmatprep.subr.bf16.mxu0 0
  %139 = vmatpush1.bf16.msra.mxu0 0
  %140 = vmatprep.subr.bf16.mxu0 0
  %141 = vmatpush1.bf16.msra.mxu0 0
  %142 = vmatprep.subr.bf16.mxu0 0
  %143 = vmatpush1.bf16.msra.mxu0 0
  %144 = vmatprep.subr.bf16.mxu0 0
  %145 = vmatpush1.bf16.msra.mxu0 0
  %146 = vmatprep.subr.bf16.mxu0 0
  %147 = vmatpush1.bf16.msra.mxu0 0
  %148 = vmatprep.subr.bf16.mxu0 0
  %149 = vmatpush1.bf16.msra.mxu0 0
  %150 = vmatprep.mubr.bf16.mxu0 0
  %151 = vmatmul.mubr.bf16.gmra.mrb[0].mxu0 %v116
  %v152 = vpop.f32.mrb[0].mxu0
  %v153 = vadd.f32 %v106, %v152
  %v154 = vpop.f32.mrb[0].mxu0
  %v155 = vpop.f32.mrb[0].mxu0
  %v156 = vpop.f32.mrb[0].mxu0
  %157 = vdwg.mxu0
  %vm158 = vcmp.gt.f32.partialorder %v153, 0.0
  %v159 = vmul.f32 %v153, 0.01
  %v160 = vsel %vm158, %v153, %v159
  %v161 = vpack.c.bf16 %v160, %v160
  %v162 = vld [vmem:[%s5] sm:$0xf]
  %v163 = vld [vmem:[%s6] sm:$0x1]
  %v165 = vlaneseq
  %v166 = vshrl.u32 %v165, 7
  %v167 = vsub.s32 0, %v166
  %v168 = vrot.slane %v163, %v167
  %vm170 = vcmask 64512
  %v172 = vsel %vm170, %v161, 0
  %vm174 = vcmask 1043456
  %v176 = vsel %vm174, %v162, 0
  %178 = vmatprep.subr.bf16.mxu0 0
  %179 = vmatpush1.bf16.msra.mxu0 %v176
  %180 = vmatprep.subr.bf16.mxu0 0
  %181 = vmatpush1.bf16.msra.mxu0 0
  %182 = vmatprep.subr.bf16.mxu0 0
  %183 = vmatpush1.bf16.msra.mxu0 0
  %184 = vmatprep.subr.bf16.mxu0 0
  %185 = vmatpush1.bf16.msra.mxu0 0
  %186 = vmatprep.subr.bf16.mxu0 0
  %187 = vmatpush1.bf16.msra.mxu0 0
  %188 = vmatprep.subr.bf16.mxu0 0
  %189 = vmatpush1.bf16.msra.mxu0 0
  %190 = vmatprep.subr.bf16.mxu0 0
  %191 = vmatpush1.bf16.msra.mxu0 0
  %192 = vmatprep.subr.bf16.mxu0 0
  %193 = vmatpush1.bf16.msra.mxu0 0
  %194 = vmatprep.subr.bf16.mxu0 0
  %195 = vmatpush1.bf16.msra.mxu0 0
  %196 = vmatprep.subr.bf16.mxu0 0
  %197 = vmatpush1.bf16.msra.mxu0 0
  %198 = vmatprep.subr.bf16.mxu0 0
  %199 = vmatpush1.bf16.msra.mxu0 0
  %200 = vmatprep.subr.bf16.mxu0 0
  %201 = vmatpush1.bf16.msra.mxu0 0
  %202 = vmatprep.subr.bf16.mxu0 0
  %203 = vmatpush1.bf16.msra.mxu0 0
  %204 = vmatprep.subr.bf16.mxu0 0
  %205 = vmatpush1.bf16.msra.mxu0 0
  %206 = vmatprep.subr.bf16.mxu0 0
  %207 = vmatpush1.bf16.msra.mxu0 0
  %208 = vmatprep.subr.bf16.mxu0 0
  %209 = vmatpush1.bf16.msra.mxu0 0
  %210 = vmatprep.mubr.bf16.mxu0 0
  %211 = vmatmul.mubr.bf16.gmra.mrb[0].mxu0 %v172
  %v212 = vpop.f32.mrb[0].mxu0
  %v213 = vadd.f32 %v168, %v212
  %v214 = vpop.f32.mrb[0].mxu0
  %v215 = vpop.f32.mrb[0].mxu0
  %v216 = vpop.f32.mrb[0].mxu0
  %217 = vdwg.mxu0
  %vm218 = vcmask 15360
  %219 = vst.msk [vmem:[%s7] sm:$0xff] %vm218, %v213
  // Predicated region
  $region30: #{tpu_custom_call.1} parent=0 // pred_check
    _
  $region31: #{tpu_custom_call.1} parent=0 // pred_check_branch
    %221 = sbr.rel (0) target = $region33
  $region32: #{tpu_custom_call.1} parent=0 // pred_region
    _
  $region33: #{tpu_custom_call.1} parent=0 // pred_fallthru
    _
  // Predicated region
  $region34: #{tpu_custom_call.1} parent=0 // pred_check
    _
  $region35: #{tpu_custom_call.1} parent=0 // pred_check_branch
    %223 = sbr.rel (0) target = $region37
  $region36: #{tpu_custom_call.1} parent=0 // pred_region
    _
  $region37: #{tpu_custom_call.1} parent=0 // pred_fallthru
    _

</llo_original>
